<compile_context>
chip_gen: v5e
topology: v5e:2x2
jax: 0.10.0
libtpu: 0.0.40
codegen_flags: <defaults>
</compile_context>

<pallas_src>
import jax
import jax.numpy as jnp
from jax import lax
from jax.experimental import pallas as pl
from jax.experimental.pallas import tpu as pltpu


def vq_kernel(x_ref, emb_ref, emb_t_ref, zq_st_ref, zq_ref, idx_ref):
    # x_ref:     (1, D, HW)  one image; channels on sublanes, spatial on lanes
    # emb_ref:   (K, D)      codebook
    # emb_t_ref: (D, K)      codebook transposed (tiny, built once in wrapper)
    # zq_st_ref: (1, D, HW)
    # zq_ref:    (1, D, HW)
    # idx_ref:   (1, 1, HW)  int32
    x = x_ref[0]                       # (D, HW) f32
    emb = emb_ref[...]                 # (K, D)
    emb_t = emb_t_ref[...]             # (D, K)
    K = emb_ref.shape[0]
    HW = x_ref.shape[2]

    # scores[k, n] = <E[k], x[:, n]>   -- single lane-dense MXU matmul.
    scores = jnp.dot(emb, x, preferred_element_type=jnp.float32)       # (K, HW)
    e_sq = jnp.sum(emb * emb, axis=1, keepdims=True)                   # (K, 1)
    # ||z - e_k||^2 = ||z||^2 + ||e_k||^2 - 2<z, e_k>; drop the per-column
    # constant ||z||^2 since it does not change the argmin over k.
    d = e_sq - 2.0 * scores                                            # (K, HW)

    # argmin over K (first index on ties, like torch.argmin), using only
    # min-reductions + select so it lowers on all TPU generations.
    d_min = jnp.min(d, axis=0, keepdims=True)                          # (1, HW)
    iota_k = lax.broadcasted_iota(jnp.int32, (K, HW), 0)
    idx = jnp.min(jnp.where(d <= d_min, iota_k, K),
                  axis=0, keepdims=True)                               # (1, HW)

    # Codebook lookup as a one-hot matmul (exactly one 1 per column).
    onehot = (iota_k == idx).astype(jnp.float32)                       # (K, HW)
    z_q = jnp.dot(emb_t, onehot, preferred_element_type=jnp.float32)   # (D, HW)

    zq_ref[0] = z_q.astype(zq_ref.dtype)
    # Straight-through: forward value is z_e + (z_q - z_e) == z_q.
    # TODO(synk): the .detach() only affects gradients; no backward here.
    zq_st_ref[0] = (x + (z_q - x)).astype(zq_st_ref.dtype)
    idx_ref[0] = idx


def vq_forward(z_e_nchw, embedding):
    """z_e_nchw: (B, D, H, W) float32; embedding: (K, D) float32.

    Returns (z_q_st, z_q, indices) with shapes
    (B, D, H, W), (B, D, H, W), (B, H*W) -- matching the PyTorch module.
    """
    B, C, H, W = z_e_nchw.shape
    K, D = embedding.shape
    assert C == D
    HW = H * W

    x = z_e_nchw.reshape(B, C, HW)     # free reshape, keeps NCHW element order
    emb_t = embedding.T                # tiny one-off (K, D) -> (D, K)

    zq_st, zq, idx = pl.pallas_call(
        vq_kernel,
        out_shape=(
            jax.ShapeDtypeStruct((B, C, HW), x.dtype),
            jax.ShapeDtypeStruct((B, C, HW), x.dtype),
            jax.ShapeDtypeStruct((B, 1, HW), jnp.int32),
        ),
        grid=(B,),
        in_specs=[
            pl.BlockSpec((1, C, HW), lambda b: (b, 0, 0)),
            pl.BlockSpec((K, D), lambda b: (0, 0)),
            pl.BlockSpec((D, K), lambda b: (0, 0)),
        ],
        out_specs=(
            pl.BlockSpec((1, C, HW), lambda b: (b, 0, 0)),
            pl.BlockSpec((1, C, HW), lambda b: (b, 0, 0)),
            pl.BlockSpec((1, 1, HW), lambda b: (b, 0, 0)),
        ),
        compiler_params=pltpu.CompilerParams(
            dimension_semantics=("parallel",)),
    )(x, embedding, emb_t)

    return (zq_st.reshape(B, C, H, W),
            zq.reshape(B, C, H, W),
            idx.reshape(B, HW))


def vq_reference(z_e_nchw, embedding):
    """Plain-JAX reference mirroring the PyTorch module exactly."""
    B, C, H, W = z_e_nchw.shape
    z_nhwc = jnp.transpose(z_e_nchw, (0, 2, 3, 1))                # (B, H, W, C)
    z_flat = z_nhwc.reshape(-1, C)                                # (N, C)
    diff = z_flat[:, None, :] - embedding[None, :, :]             # (N, K, C)
    dist = jnp.sqrt(jnp.sum(diff * diff, axis=-1))                # cdist
    idx = jnp.argmin(dist, axis=1)                                # (N,)
    z_q = embedding[idx].reshape(B, H, W, C)
    z_q_st = z_nhwc + (z_q - z_nhwc)
    return (jnp.transpose(z_q_st, (0, 3, 1, 2)),
            jnp.transpose(z_q, (0, 3, 1, 2)),
            idx.reshape(B, H * W))


if __name__ == "__main__":
    B, D, H, W = 2, 4, 16, 16     # small shapes consistent with the module
    K = 32                        # codebook size

    key = jax.random.PRNGKey(0)
    kx, ke = jax.random.split(key, 2)

    z_e = jax.random.normal(kx, (B, D, H, W), dtype=jnp.float32)
    # nn.Embedding(K, D).weight.data.uniform_(-1/K, 1/K)
    embedding = jax.random.uniform(ke, (K, D), dtype=jnp.float32,
                                   minval=-1.0 / K, maxval=1.0 / K)

    zq_st, zq, idx = vq_forward(z_e, embedding)
    zq_st = jax.block_until_ready(zq_st)
    zq = jax.block_until_ready(zq)
    idx = jax.block_until_ready(idx)

    ref_st, ref_q, ref_idx = vq_reference(z_e, embedding)

    assert zq_st.shape == (B, D, H, W)
    assert zq.shape == (B, D, H, W)
    assert idx.shape == (B, H * W)
    assert jnp.array_equal(idx, ref_idx.astype(jnp.int32))
    assert jnp.allclose(zq, ref_q, atol=1e-5, rtol=1e-5)
    assert jnp.allclose(zq_st, ref_st, atol=1e-5, rtol=1e-5)

    print("KERNEL_OK")
</pallas_src>

<mosaic_0001>
module attributes {stable_mosaic.version = 11 : i64} {
  func.func @vq_kernel(%arg0: i32, %arg1: memref<1x4x256xf32, #tpu.memory_space<vmem>>, %arg2: memref<32x4xf32, #tpu.memory_space<vmem>>, %arg3: memref<4x32xf32, #tpu.memory_space<vmem>>, %arg4: memref<1x4x256xf32, #tpu.memory_space<vmem>>, %arg5: memref<1x4x256xf32, #tpu.memory_space<vmem>>, %arg6: memref<1x1x256xi32, #tpu.memory_space<vmem>>) attributes {dimension_semantics = [#tpu.dimension_semantics<parallel>], iteration_bounds = array<i64: 2>, scalar_prefetch = 0 : i64, scratch_operands = 0 : i64, tpu.core_type = #tpu.core_type<tc>, window_params = [{transform_indices = @transform_0, window_bounds = array<i64: 1, 4, 256>}, {pipeline_mode = #tpu.pipeline_mode<synchronous>, transform_indices = @transform_1, window_bounds = array<i64: 32, 4>}, {pipeline_mode = #tpu.pipeline_mode<synchronous>, transform_indices = @transform_2, window_bounds = array<i64: 4, 32>}, {transform_indices = @transform_3, window_bounds = array<i64: 1, 4, 256>}, {transform_indices = @transform_4, window_bounds = array<i64: 1, 4, 256>}, {transform_indices = @transform_5, window_bounds = array<i64: 1, 1, 256>}]} {
    %c0 = arith.constant 0 : index
    %c0_0 = arith.constant 0 : index
    %c0_1 = arith.constant 0 : index
    %0 = vector.load %arg1[%c0, %c0_0, %c0_1] : memref<1x4x256xf32, #tpu.memory_space<vmem>>, vector<1x4x256xf32>
    %1 = vector.shape_cast %0 : vector<1x4x256xf32> to vector<4x256xf32>
    %c0_2 = arith.constant 0 : index
    %c0_3 = arith.constant 0 : index
    %2 = vector.load %arg2[%c0_2, %c0_3] : memref<32x4xf32, #tpu.memory_space<vmem>>, vector<32x4xf32>
    %c0_4 = arith.constant 0 : index
    %c0_5 = arith.constant 0 : index
    %3 = vector.load %arg3[%c0_4, %c0_5] : memref<4x32xf32, #tpu.memory_space<vmem>>, vector<4x32xf32>
    %cst = arith.constant dense<0.000000e+00> : vector<32x256xf32>
    %4 = tpu.matmul %2, %1, %cst {dimension_numbers = #tpu.dot_dimension_numbers<[1], [0], [0], [1], [0, 0, 1, 1], [], []>} : vector<32x4xf32>, vector<4x256xf32>, vector<32x256xf32> -> vector<32x256xf32>
    %5 = arith.mulf %2, %2 : vector<32x4xf32>
    %cst_6 = arith.constant dense<0.000000e+00> : vector<32xf32>
    %6 = vector.multi_reduction <add>, %5, %cst_6 [1] : vector<32x4xf32> to vector<32xf32>
    %7 = vector.shape_cast %6 : vector<32xf32> to vector<32x1xf32>
    %cst_7 = arith.constant 2.000000e+00 : f32
    %8 = vector.broadcast %cst_7 : f32 to vector<32x256xf32>
    %9 = arith.mulf %8, %4 : vector<32x256xf32>
    %10 = vector.broadcast %7 : vector<32x1xf32> to vector<32x256xf32>
    %11 = arith.subf %10, %9 : vector<32x256xf32>
    %cst_8 = arith.constant dense<0x7F800000> : vector<256xf32>
    %12 = vector.multi_reduction <minimumf>, %11, %cst_8 [0] : vector<32x256xf32> to vector<256xf32>
    %13 = vector.shape_cast %12 : vector<256xf32> to vector<1x256xf32>
    %14 = tpu.iota {dimensions = array<i32: 0>} : vector<32x256xi32>
    %15 = vector.broadcast %13 : vector<1x256xf32> to vector<32x256xf32>
    %16 = arith.cmpf ole, %11, %15 : vector<32x256xf32>
    %c32_i32 = arith.constant 32 : i32
    %17 = vector.broadcast %c32_i32 : i32 to vector<32x256xi32>
    %18 = arith.select %16, %14, %17 : vector<32x256xi1>, vector<32x256xi32>
    %cst_9 = arith.constant dense<2147483647> : vector<256xi32>
    %19 = vector.multi_reduction <minsi>, %18, %cst_9 [0] : vector<32x256xi32> to vector<256xi32>
    %20 = vector.shape_cast %19 : vector<256xi32> to vector<1x256xi32>
    %21 = vector.broadcast %20 : vector<1x256xi32> to vector<32x256xi32>
    %22 = arith.cmpi eq, %14, %21 : vector<32x256xi32>
    %23 = arith.extui %22 : vector<32x256xi1> to vector<32x256xi32>
    %24 = arith.sitofp %23 : vector<32x256xi32> to vector<32x256xf32>
    %cst_10 = arith.constant dense<0.000000e+00> : vector<4x256xf32>
    %25 = tpu.matmul %3, %24, %cst_10 {dimension_numbers = #tpu.dot_dimension_numbers<[1], [0], [0], [1], [0, 0, 1, 1], [], []>} : vector<4x32xf32>, vector<32x256xf32>, vector<4x256xf32> -> vector<4x256xf32>
    %c0_11 = arith.constant 0 : index
    %c0_12 = arith.constant 0 : index
    %c0_13 = arith.constant 0 : index
    %26 = vector.load %arg5[%c0_11, %c0_12, %c0_13] : memref<1x4x256xf32, #tpu.memory_space<vmem>>, vector<1x4x256xf32>
    %27 = vector.shape_cast %26 : vector<1x4x256xf32> to vector<4x256xf32>
    %28 = vector.shape_cast %25 : vector<4x256xf32> to vector<1x4x256xf32>
    tpu.vector_store %arg5[%c0_11, %c0_12, %c0_13], %28 {strides = array<i32>} : memref<1x4x256xf32, #tpu.memory_space<vmem>>, vector<1x4x256xf32>,
    %29 = arith.subf %25, %1 : vector<4x256xf32>
    %30 = arith.addf %1, %29 : vector<4x256xf32>
    %c0_14 = arith.constant 0 : index
    %c0_15 = arith.constant 0 : index
    %c0_16 = arith.constant 0 : index
    %31 = vector.load %arg4[%c0_14, %c0_15, %c0_16] : memref<1x4x256xf32, #tpu.memory_space<vmem>>, vector<1x4x256xf32>
    %32 = vector.shape_cast %31 : vector<1x4x256xf32> to vector<4x256xf32>
    %33 = vector.shape_cast %30 : vector<4x256xf32> to vector<1x4x256xf32>
    tpu.vector_store %arg4[%c0_14, %c0_15, %c0_16], %33 {strides = array<i32>} : memref<1x4x256xf32, #tpu.memory_space<vmem>>, vector<1x4x256xf32>,
    %c0_17 = arith.constant 0 : index
    %c0_18 = arith.constant 0 : index
    %c0_19 = arith.constant 0 : index
    %34 = vector.load %arg6[%c0_17, %c0_18, %c0_19] : memref<1x1x256xi32, #tpu.memory_space<vmem>>, vector<1x1x256xi32>
    %35 = vector.shape_cast %34 : vector<1x1x256xi32> to vector<1x256xi32>
    %36 = vector.shape_cast %20 : vector<1x256xi32> to vector<1x1x256xi32>
    tpu.vector_store %arg6[%c0_17, %c0_18, %c0_19], %36 {strides = array<i32>} : memref<1x1x256xi32, #tpu.memory_space<vmem>>, vector<1x1x256xi32>,
    return
  }
  func.func @transform_0(%arg0: i32) -> (i32, i32, i32) {
    %c0_i32 = arith.constant 0 : i32
    %c0_i32_0 = arith.constant 0 : i32
    %c0_i32_1 = arith.constant 0 : i32
    return %arg0, %c0_i32, %c0_i32_0 : i32, i32, i32
  }
  func.func @transform_1(%arg0: i32) -> (i32, i32) {
    %c0_i32 = arith.constant 0 : i32
    %c0_i32_0 = arith.constant 0 : i32
    %c0_i32_1 = arith.constant 0 : i32
    return %c0_i32, %c0_i32_0 : i32, i32
  }
  func.func @transform_2(%arg0: i32) -> (i32, i32) {
    %c0_i32 = arith.constant 0 : i32
    %c0_i32_0 = arith.constant 0 : i32
    %c0_i32_1 = arith.constant 0 : i32
    return %c0_i32, %c0_i32_0 : i32, i32
  }
  func.func @transform_3(%arg0: i32) -> (i32, i32, i32) {
    %c0_i32 = arith.constant 0 : i32
    %c0_i32_0 = arith.constant 0 : i32
    %c0_i32_1 = arith.constant 0 : i32
    return %arg0, %c0_i32, %c0_i32_0 : i32, i32, i32
  }
  func.func @transform_4(%arg0: i32) -> (i32, i32, i32) {
    %c0_i32 = arith.constant 0 : i32
    %c0_i32_0 = arith.constant 0 : i32
    %c0_i32_1 = arith.constant 0 : i32
    return %arg0, %c0_i32, %c0_i32_0 : i32, i32, i32
  }
  func.func @transform_5(%arg0: i32) -> (i32, i32, i32) {
    %c0_i32 = arith.constant 0 : i32
    %c0_i32_0 = arith.constant 0 : i32
    %c0_i32_1 = arith.constant 0 : i32
    return %arg0, %c0_i32, %c0_i32_0 : i32, i32, i32
  }
}

</mosaic_0001>

<llo_original>
// kernel: tpu_custom_call.1
$region0: #{tpu_custom_call.1}
  #allocation0 [shape = 'u32[]', space=smem, size = 0x4, offset = 0x4, fixed_abs, tag = 'smem constant byte address 0x4 - core index']
  #allocation1 [shape = 'u32[72,128]{1,0:T(1,128)}', space=vmem, size = 0x9000, scoped, tag = 'internal scratch']
  %s0 = inlined_call_operand.vmem [shape: f32[2,4,256], index: 0, kind: input, shape index: {}]
  %s1 = inlined_call_operand.vmem [shape: f32[32,4], index: 1, kind: input, shape index: {}]
  %s2 = inlined_call_operand.vmem [shape: f32[4,32], index: 2, kind: input, shape index: {}]
  %s3 = inlined_call_operand.hbm [shape: f32[2,4,256], index: 3, kind: output, shape index: {0}]
  %s4 = inlined_call_operand.hbm [shape: f32[2,4,256], index: 4, kind: output, shape index: {1}]
  %s5 = inlined_call_operand.hbm [shape: s32[2,1,256], index: 5, kind: output, shape index: {2}]
  %6 = xla_tuple %s3, %s4, %s5
  %s7 = sld [smem:[#allocation0]]
  $region61: #{tpu_custom_call.1} parent=0
    _
  %s9 = ssub.s32 1, %s7
  %s10 = scalar_select 0, %s9, %s7
  $region1: #{tpu_custom_call.1} parent=0
    #allocation2 [shape = 'u8[8192]{0}', space=vmem, size = 0x2000, scoped, tag = 'output window, operand 0']
    #allocation3 [shape = 's32[2]{0}', space=sflag, size = 0x8, scoped, tag = 'scoped memory for tpu_custom_call.1']
    #allocation4 [shape = 'u8[8192]{0}', space=vmem, size = 0x2000, scoped, tag = 'output window, operand 1']
    #allocation5 [shape = 's32[2]{0}', space=sflag, size = 0x8, scoped, tag = 'scoped memory for tpu_custom_call.1']
    #allocation6 [shape = 'u8[2048]{0}', space=vmem, size = 0x800, scoped, tag = 'output window, operand 2']
    %11 = vsyncpa [#allocation3], 0
    %s12 = scalar_lea.sflag [#allocation3], 1
    %13 = vsyncpa %s12, 0
    %14 = vsyncpa [#allocation5], 0
    %s15 = scalar_lea.sflag [#allocation5], 1
    %16 = vsyncpa %s15, 0
    loop: start=0, step=1, limit=4
    $region2: #{tpu_custom_call.1} parent=1 // loop_pre_header
      _
    $region3: #{tpu_custom_call.1} parent=1 // loop_header
      %s18 = sphi 0, %s22
      %p19 = scmp.ge.s32.totalorder %s18, 4
      %s28 = sphi 0, %s30
      %s31 = sphi 0, %s28
      %s32 = sphi 0, %s31
      %s48 = sphi 0, %s32
      %s52 = sphi 0, %s52
      %s54 = sphi 0, %s52
      %s55 = sphi 0, %s54
      %s69 = sphi 0, %s55
      %s73 = sphi 0, %s73
      %s75 = sphi 0, %s73
      %s76 = sphi 0, %s75
      %s90 = sphi 0, %s76
      %s96 = sphi 0, %s98
      %s99 = sphi 0, %s96
      %s100 = sphi 0, %s99
      %s116 = sphi 0, %s100
      %s122 = sphi 0, %s124
      %s125 = sphi 0, %s122
      %s126 = sphi 0, %s125
      %s142 = sphi 0, %s126
      %s148 = sphi 0, %s150
      %s151 = sphi 0, %s148
      %s152 = sphi 0, %s151
      %s168 = sphi 0, %s152
    $region4: #{tpu_custom_call.1} parent=1 // loop_header_branch
      %21 = sbr.rel (%p19) target = $region8
    $region5: #{tpu_custom_call.1} parent=1 // loop_body
      %s23 = ssub.s32 %s18, 1
      %s24 = ssub.s32 %s18, 2
      %s25 = sadd.s32 %s18, 1
      %s26 = ssub.s32 %s18, %s25
      %p27 = scmp.eq.s32.totalorder %s26, 0
      %s29 = sadd.s32 %s28, 1
      %s30 = scalar_select %p27, %s28, %s29
      %p33 = pneg %p27
      %p34 = scmp.eq.s32.totalorder %s18, 1
      %p35 = por %p33, %p34
      %p36 = scmp.ne.s32.totalorder %s28, %s31
      %p37 = scmp.eq.s32.totalorder %s18, 0
      %p38 = por %p36, %p37
      %p39 = scmp.ne.s32.totalorder %s28, %s31
      %p40 = scmp.eq.s32.totalorder %s23, 1
      %p41 = por %p39, %p40
      %p42 = scmp.ne.s32.totalorder %s31, %s32
      %p43 = scmp.eq.s32.totalorder %s23, 0
      %p44 = por %p42, %p43
      %p45 = scmp.ne.s32.totalorder %s31, %s32
      %p46 = scmp.eq.s32.totalorder %s24, 1
      %p47 = por %p45, %p46
      %p49 = scmp.ne.s32.totalorder %s32, %s48
      %p50 = scmp.eq.s32.totalorder %s24, 0
      %p51 = por %p49, %p50
      %s53 = sadd.s32 %s52, 1
      %p56 = scmp.eq.s32.totalorder %s18, 1
      %p57 = scmp.ne.s32.totalorder %s52, %s54
      %p58 = scmp.eq.s32.totalorder %s18, 0
      %p59 = por %p57, %p58
      %p60 = scmp.ne.s32.totalorder %s52, %s54
      %p61 = scmp.eq.s32.totalorder %s23, 1
      %p62 = por %p60, %p61
      %p63 = scmp.ne.s32.totalorder %s54, %s55
      %p64 = scmp.eq.s32.totalorder %s23, 0
      %p65 = por %p63, %p64
      %p66 = scmp.ne.s32.totalorder %s54, %s55
      %p67 = scmp.eq.s32.totalorder %s24, 1
      %p68 = por %p66, %p67
      %p70 = scmp.ne.s32.totalorder %s55, %s69
      %p71 = scmp.eq.s32.totalorder %s24, 0
      %p72 = por %p70, %p71
      %s74 = sadd.s32 %s73, 1
      %p77 = scmp.eq.s32.totalorder %s18, 1
      %p78 = scmp.ne.s32.totalorder %s73, %s75
      %p79 = scmp.eq.s32.totalorder %s18, 0
      %p80 = por %p78, %p79
      %p81 = scmp.ne.s32.totalorder %s73, %s75
      %p82 = scmp.eq.s32.totalorder %s23, 1
      %p83 = por %p81, %p82
      %p84 = scmp.ne.s32.totalorder %s75, %s76
      %p85 = scmp.eq.s32.totalorder %s23, 0
      %p86 = por %p84, %p85
      %p87 = scmp.ne.s32.totalorder %s75, %s76
      %p88 = scmp.eq.s32.totalorder %s24, 1
      %p89 = por %p87, %p88
      %p91 = scmp.ne.s32.totalorder %s76, %s90
      %p92 = scmp.eq.s32.totalorder %s24, 0
      %p93 = por %p91, %p92
      %s94 = ssub.s32 %s18, %s25
      %p95 = scmp.eq.s32.totalorder %s94, 0
      %s97 = sadd.s32 %s96, 1
      %s98 = scalar_select %p95, %s96, %s97
      %p101 = pneg %p95
      %p102 = scmp.eq.s32.totalorder %s18, 1
      %p103 = por %p101, %p102
      %p104 = scmp.ne.s32.totalorder %s96, %s99
      %p105 = scmp.eq.s32.totalorder %s18, 0
      %p106 = por %p104, %p105
      %p107 = scmp.ne.s32.totalorder %s96, %s99
      %p108 = scmp.eq.s32.totalorder %s23, 1
      %p109 = por %p107, %p108
      %p110 = scmp.ne.s32.totalorder %s99, %s100
      %p111 = scmp.eq.s32.totalorder %s23, 0
      %p112 = por %p110, %p111
      %p113 = scmp.ne.s32.totalorder %s99, %s100
      %p114 = scmp.eq.s32.totalorder %s24, 1
      %p115 = por %p113, %p114
      %p117 = scmp.ne.s32.totalorder %s100, %s116
      %p118 = scmp.eq.s32.totalorder %s24, 0
      %p119 = por %p117, %p118
      %s120 = ssub.s32 %s18, %s25
      %p121 = scmp.eq.s32.totalorder %s120, 0
      %s123 = sadd.s32 %s122, 1
      %s124 = scalar_select %p121, %s122, %s123
      %p127 = pneg %p121
      %p128 = scmp.eq.s32.totalorder %s18, 1
      %p129 = por %p127, %p128
      %p130 = scmp.ne.s32.totalorder %s122, %s125
      %p131 = scmp.eq.s32.totalorder %s18, 0
      %p132 = por %p130, %p131
      %p133 = scmp.ne.s32.totalorder %s122, %s125
      %p134 = scmp.eq.s32.totalorder %s23, 1
      %p135 = por %p133, %p134
      %p136 = scmp.ne.s32.totalorder %s125, %s126
      %p137 = scmp.eq.s32.totalorder %s23, 0
      %p138 = por %p136, %p137
      %p139 = scmp.ne.s32.totalorder %s125, %s126
      %p140 = scmp.eq.s32.totalorder %s24, 1
      %p141 = por %p139, %p140
      %p143 = scmp.ne.s32.totalorder %s126, %s142
      %p144 = scmp.eq.s32.totalorder %s24, 0
      %p145 = por %p143, %p144
      %s146 = ssub.s32 %s18, %s25
      %p147 = scmp.eq.s32.totalorder %s146, 0
      %s149 = sadd.s32 %s148, 1
      %s150 = scalar_select %p147, %s148, %s149
      %p153 = pneg %p147
      %p154 = scmp.eq.s32.totalorder %s18, 1
      %p155 = por %p153, %p154
      %p156 = scmp.ne.s32.totalorder %s148, %s151
      %p157 = scmp.eq.s32.totalorder %s18, 0
      %p158 = por %p156, %p157
      %p159 = scmp.ne.s32.totalorder %s148, %s151
      %p160 = scmp.eq.s32.totalorder %s23, 1
      %p161 = por %p159, %p160
      %p162 = scmp.ne.s32.totalorder %s151, %s152
      %p163 = scmp.eq.s32.totalorder %s23, 0
      %p164 = por %p162, %p163
      %p165 = scmp.ne.s32.totalorder %s151, %s152
      %p166 = scmp.eq.s32.totalorder %s24, 1
      %p167 = por %p165, %p166
      %p169 = scmp.ne.s32.totalorder %s152, %s168
      %p170 = scmp.eq.s32.totalorder %s24, 0
      %p171 = por %p169, %p170
      %p172 = scmp.le.s32.totalorder 1, %s18
      %p173 = scmp.lt.s32.totalorder %s18, 3
      %p174 = pnand %p172, %p173
      %p175 = pneg %p174
      // Predicated region
      $region9: #{tpu_custom_call.1} parent=5 // pred_check
        _
      $region10: #{tpu_custom_call.1} parent=5 // pred_check_branch
        %177 = sbr.rel (%p174) target = $region12
      $region11: #{tpu_custom_call.1} parent=5 // pred_region
        %s178 = ssub.s32 %s18, 1
        // Predicated region
        $region13: #{tpu_custom_call.1} parent=11 // pred_check
          %p179 = pneg %p65
        $region14: #{tpu_custom_call.1} parent=11 // pred_check_branch
          %181 = sbr.rel (%p179) target = $region16
        $region15: #{tpu_custom_call.1} parent=11 // pred_region
          _
        $region16: #{tpu_custom_call.1} parent=11 // pred_fallthru
          _
        // Predicated region
        $region17: #{tpu_custom_call.1} parent=11 // pred_check
          %p182 = pneg %p86
        $region18: #{tpu_custom_call.1} parent=11 // pred_check_branch
          %184 = sbr.rel (%p182) target = $region20
        $region19: #{tpu_custom_call.1} parent=11 // pred_region
          _
        $region20: #{tpu_custom_call.1} parent=11 // pred_fallthru
          _
      $region12: #{tpu_custom_call.1} parent=5 // pred_fallthru
        _
      %p185 = scmp.lt.s32.totalorder %s18, 2
      // Predicated region
      $region21: #{tpu_custom_call.1} parent=5 // pred_check
        %p186 = pneg %p185
      $region22: #{tpu_custom_call.1} parent=5 // pred_check_branch
        %188 = sbr.rel (%p186) target = $region24
      $region23: #{tpu_custom_call.1} parent=5 // pred_region
        // Predicated region
        $region25: #{tpu_custom_call.1} parent=23 // pred_check
          %p189 = pneg %p38
        $region26: #{tpu_custom_call.1} parent=23 // pred_check_branch
          %191 = sbr.rel (%p189) target = $region28
        $region27: #{tpu_custom_call.1} parent=23 // pred_region
          %p192 = scmp.lt.s32.totalorder %s18, 1
          %s193 = scalar_select %p192, %s18, 1
          %s194 = smul.addr %s193, 2
          %s195 = smul.addr %s194, 4
          %s196 = scalar_lea.vmem %s0, %s195
        $region28: #{tpu_custom_call.1} parent=23 // pred_fallthru
          _
      $region24: #{tpu_custom_call.1} parent=5 // pred_fallthru
        _
      %p197 = scmp.le.s32.totalorder 1, %s18
      %p198 = scmp.lt.s32.totalorder %s18, 3
      %p199 = pnand %p197, %p198
      %p200 = pneg %p199
      // Predicated region
      $region29: #{tpu_custom_call.1} parent=5 // pred_check
        _
      $region30: #{tpu_custom_call.1} parent=5 // pred_check_branch
        %202 = sbr.rel (%p199) target = $region32
      $region31: #{tpu_custom_call.1} parent=5 // pred_region
        %s203 = ssub.s32 %s18, 1
        %p204 = scmp.lt.s32.totalorder %s23, 1
        %s205 = scalar_select %p204, %s23, 1
        %s206 = smul.addr %s205, 2
        %s207 = smul.addr %s206, 4
        %s208 = scalar_lea.vmem %s0, %s207
        %p209 = pneg %p44
        %p210 = pneg %p41
        %p211 = pneg %p65
        %p212 = pneg %p62
        %p213 = pneg %p86
        %p214 = pneg %p83
        %p215 = pneg %p112
        %p216 = pneg %p109
        %s217 = sand.u32 %s99, 1
        %s218 = scalar_lea.sflag [#allocation3], %s217
        %s219 = sand.u32 %s99, 1
        %s220 = smul.addr %s219, 8
        %s221 = scalar_lea.vmem [#allocation2], %s220
        %p222 = pneg %p138
        %p223 = pneg %p135
        %s224 = sand.u32 %s23, 1
        %s225 = scalar_lea.sflag [#allocation5], %s224
        %s226 = sand.u32 %s125, 1
        %s227 = smul.addr %s226, 8
        %s228 = scalar_lea.vmem [#allocation4], %s227
        %p229 = pneg %p164
        %p230 = pneg %p161
        %s231 = sand.u32 %s23, 1
        %s232 = scalar_lea.sflag [#allocation5], %s231
        %s233 = sand.u32 %s151, 1
        %s234 = smul.addr %s233, 2
        %s235 = scalar_lea.vmem [#allocation6], %s234
        %p236 = scmp.lt.s32.totalorder %s23, 1
        %s237 = scalar_select %p236, %s23, 1
        %s238 = smul.addr %s237, 2
        %s239 = smul.addr %s238, 4
        %s240 = scalar_lea.vmem %s0, %s239
        %v241 = vld [vmem:[%s240] sm:$0xff]
        %v242 = vld [vmem:[%s1] sm:$0xff]
        %v243 = vld [vmem:[%s1 + $0x8] sm:$0xff]
        %v244 = vld [vmem:[%s1 + $0x10] sm:$0xff]
        %v245 = vld [vmem:[%s1 + $0x18] sm:$0xff]
        %v246 = vld [vmem:[%s2] sm:$0xf]
        %248 = vst [vmem:[#allocation1] ss:$2 sm:$0xff] %v241
        %v249 = vld.sshfl [vmem:[#allocation1] sm:$0xff pattern:$0x75316420]
        %v250 = vld.sshfl [vmem:[#allocation1 + $0x8] sm:$0xff pattern:$0x75316420]
        %vm251 = vcmask 31744
        %v253 = vsel %vm251, %v242, 0
        %v256 = vsel %vm251, %v243, 0
        %v259 = vsel %vm251, %v244, 0
        %v262 = vsel %vm251, %v245, 0
        %vm264 = vcmask 1043456
        %v265 = vsel %vm264, %v249, 0
        %v267 = vsel %vm264, %v250, 0
        %269 = vmatpush.msra.mxu0 0.0
        %270 = vmatpush.msra.mxu0 0.0
        %271 = vmatpush.msra.mxu0 0.0
        %272 = vmatpush.msra.mxu0 0.0
        %273 = vmatpush.msra.mxu0 0.0
        %274 = vmatpush.msra.mxu0 0.0
        %275 = vmatpush.msra.mxu0 0.0
        %276 = vmatpush.msra.mxu0 0.0
        %277 = vmatpush.msra.mxu0 0.0
        %278 = vmatpush.msra.mxu0 0.0
        %279 = vmatpush.msra.mxu0 0.0
        %280 = vmatpush.msra.mxu0 0.0
        %281 = vmatpush.msra.mxu0 0.0
        %282 = vmatpush.msra.mxu0 0.0
        %283 = vmatpush.msra.mxu0 0.0
        %284 = vmatpush.msra.mxu0 %v265
        %285 = vmatmul.f32.gmra.mxu0 %v253
        %v286 = vpop.f32.mrf.mxu0
        %v287 = vadd.f32 0.0, %v286
        %288 = vmatmul.f32.gmra.mxu0 %v256
        %v289 = vpop.f32.mrf.mxu0
        %v290 = vadd.f32 0.0, %v289
        %291 = vmatmul.f32.gmra.mxu0 %v259
        %v292 = vpop.f32.mrf.mxu0
        %v293 = vadd.f32 0.0, %v292
        %294 = vmatmul.f32.gmra.mxu0 %v262
        %v295 = vpop.f32.mrf.mxu0
        %v296 = vadd.f32 0.0, %v295
        %297 = vdwg.mxu0
        %298 = vmatpush.msra.mxu0 0.0
        %299 = vmatpush.msra.mxu0 0.0
        %300 = vmatpush.msra.mxu0 0.0
        %301 = vmatpush.msra.mxu0 0.0
        %302 = vmatpush.msra.mxu0 0.0
        %303 = vmatpush.msra.mxu0 0.0
        %304 = vmatpush.msra.mxu0 0.0
        %305 = vmatpush.msra.mxu0 0.0
        %306 = vmatpush.msra.mxu0 0.0
        %307 = vmatpush.msra.mxu0 0.0
        %308 = vmatpush.msra.mxu0 0.0
        %309 = vmatpush.msra.mxu0 0.0
        %310 = vmatpush.msra.mxu0 0.0
        %311 = vmatpush.msra.mxu0 0.0
        %312 = vmatpush.msra.mxu0 0.0
        %313 = vmatpush.msra.mxu0 %v267
        %314 = vmatmul.f32.gmra.mxu0 %v253
        %v315 = vpop.f32.mrf.mxu0
        %v316 = vadd.f32 0.0, %v315
        %317 = vmatmul.f32.gmra.mxu0 %v256
        %v318 = vpop.f32.mrf.mxu0
        %v319 = vadd.f32 0.0, %v318
        %320 = vmatmul.f32.gmra.mxu0 %v259
        %v321 = vpop.f32.mrf.mxu0
        %v322 = vadd.f32 0.0, %v321
        %323 = vmatmul.f32.gmra.mxu0 %v262
        %v324 = vpop.f32.mrf.mxu0
        %v325 = vadd.f32 0.0, %v324
        %326 = vdwg.mxu0
        %v327 = vmul.f32 %v242, %v242
        %v328 = vmul.f32 %v243, %v243
        %v329 = vmul.f32 %v244, %v244
        %v330 = vmul.f32 %v245, %v245
        %v331 = vsel %vm251, %v327, 0.0
        %332 = vadd.xlane.f32.xlu0 %v331
        %v333 = vpop.xlane.xlu0 %332
        %v334 = vsel %vm251, %v328, 0.0
        %335 = vadd.xlane.f32.xlu0 %v334
        %v336 = vpop.xlane.xlu0 %335
        %v337 = vsel %vm251, %v329, 0.0
        %338 = vadd.xlane.f32.xlu0 %v337
        %v339 = vpop.xlane.xlu0 %338
        %v340 = vsel %vm251, %v330, 0.0
        %341 = vadd.xlane.f32.xlu0 %v340
        %v342 = vpop.xlane.xlu0 %341
        %v343 = vmul.f32 %v287, 2.0
        %v344 = vmul.f32 %v316, 2.0
        %v345 = vmul.f32 %v290, 2.0
        %v346 = vmul.f32 %v319, 2.0
        %v347 = vmul.f32 %v293, 2.0
        %v348 = vmul.f32 %v322, 2.0
        %v349 = vmul.f32 %v296, 2.0
        %v350 = vmul.f32 %v325, 2.0
        %v351 = vsub.f32 %v333, %v343
        %v352 = vsub.f32 %v333, %v344
        %v353 = vsub.f32 %v336, %v345
        %v354 = vsub.f32 %v336, %v346
        %v355 = vsub.f32 %v339, %v347
        %v356 = vsub.f32 %v339, %v348
        %v357 = vsub.f32 %v342, %v349
        %v358 = vsub.f32 %v342, %v350
        %v359 = vmin.f32 %v351, %v355
        %v360 = vmin.f32 %v353, %v357
        %v361 = vmin.f32 %v359, %v360
        %v362 = vrot.slane %v361, 4
        %v363 = vmin.f32 %v361, %v362
        %v364 = vrot.slane %v363, 2
        %v365 = vmin.f32 %v363, %v364
        %v366 = vrot.slane %v365, 1
        %v367 = vmin.f32 %v365, %v366
        %v368 = vmin.f32 %v352, %v356
        %v369 = vmin.f32 %v354, %v358
        %v370 = vmin.f32 %v368, %v369
        %v371 = vrot.slane %v370, 4
        %v372 = vmin.f32 %v370, %v371
        %v373 = vrot.slane %v372, 2
        %v374 = vmin.f32 %v372, %v373
        %v375 = vrot.slane %v374, 1
        %v376 = vmin.f32 %v374, %v375
        %v377 = vlaneseq
        %v378 = vshrl.u32 %v377, 7
        %v379 = vadd.s32 %v378, 8
        %v380 = vadd.s32 %v378, 16
        %v381 = vadd.s32 %v378, 24
        %vm382 = vcmp.le.f32.partialorder %v351, %v367
        %vm383 = vcmp.le.f32.partialorder %v352, %v376
        %vm384 = vcmp.le.f32.partialorder %v353, %v367
        %vm385 = vcmp.le.f32.partialorder %v354, %v376
        %vm386 = vcmp.le.f32.partialorder %v355, %v367
        %vm387 = vcmp.le.f32.partialorder %v356, %v376
        %vm388 = vcmp.le.f32.partialorder %v357, %v367
        %vm389 = vcmp.le.f32.partialorder %v358, %v376
        %v390 = vsel %vm382, %v378, 32
        %v391 = vsel %vm383, %v378, 32
        %v392 = vsel %vm384, %v379, 32
        %v393 = vsel %vm385, %v379, 32
        %v394 = vsel %vm386, %v380, 32
        %v395 = vsel %vm387, %v380, 32
        %v396 = vsel %vm388, %v381, 32
        %v397 = vsel %vm389, %v381, 32
        %vm398 = vcmp.lt.s32.totalorder %v390, %v394
        %v399 = vsel %vm398, %v390, %v394
        %vm400 = vcmp.lt.s32.totalorder %v392, %v396
        %v401 = vsel %vm400, %v392, %v396
        %vm402 = vcmp.lt.s32.totalorder %v399, %v401
        %v403 = vsel %vm402, %v399, %v401
        %v404 = vrot.slane %v403, 4
        %vm405 = vcmp.lt.s32.totalorder %v403, %v404
        %v406 = vsel %vm405, %v403, %v404
        %v407 = vrot.slane %v406, 2
        %vm408 = vcmp.lt.s32.totalorder %v406, %v407
        %v409 = vsel %vm408, %v406, %v407
        %v410 = vrot.slane %v409, 1
        %vm411 = vcmp.lt.s32.totalorder %v409, %v410
        %v412 = vsel %vm411, %v409, %v410
        %vm413 = vcmp.lt.s32.totalorder %v391, %v395
        %v414 = vsel %vm413, %v391, %v395
        %vm415 = vcmp.lt.s32.totalorder %v393, %v397
        %v416 = vsel %vm415, %v393, %v397
        %vm417 = vcmp.lt.s32.totalorder %v414, %v416
        %v418 = vsel %vm417, %v414, %v416
        %v419 = vrot.slane %v418, 4
        %vm420 = vcmp.lt.s32.totalorder %v418, %v419
        %v421 = vsel %vm420, %v418, %v419
        %v422 = vrot.slane %v421, 2
        %vm423 = vcmp.lt.s32.totalorder %v421, %v422
        %v424 = vsel %vm423, %v421, %v422
        %v425 = vrot.slane %v424, 1
        %vm426 = vcmp.lt.s32.totalorder %v424, %v425
        %v427 = vsel %vm426, %v424, %v425
        %vm428 = vcmp.eq.s32.totalorder %v378, %v412
        %vm429 = vcmp.eq.s32.totalorder %v378, %v427
        %vm430 = vcmp.eq.s32.totalorder %v379, %v412
        %vm431 = vcmp.eq.s32.totalorder %v379, %v427
        %vm432 = vcmp.eq.s32.totalorder %v380, %v412
        %vm433 = vcmp.eq.s32.totalorder %v380, %v427
        %vm434 = vcmp.eq.s32.totalorder %v381, %v412
        %vm435 = vcmp.eq.s32.totalorder %v381, %v427
        %v436 = vsel %vm428, 1, 0
        %v437 = vsel %vm429, 1, 0
        %v438 = vsel %vm430, 1, 0
        %v439 = vsel %vm431, 1, 0
        %v440 = vsel %vm432, 1, 0
        %v441 = vsel %vm433, 1, 0
        %v442 = vsel %vm434, 1, 0
        %v443 = vsel %vm435, 1, 0
        %v444 = vcvt.s32.f32 %v436
        %v445 = vcvt.s32.f32 %v437
        %v446 = vcvt.s32.f32 %v438
        %v447 = vcvt.s32.f32 %v439
        %v448 = vcvt.s32.f32 %v440
        %v449 = vcvt.s32.f32 %v441
        %v450 = vcvt.s32.f32 %v442
        %v451 = vcvt.s32.f32 %v443
        %vm452 = vcmask 261120
        %v454 = vsel %vm452, %v246, 0
        %456 = vmatpush.msra.mxu0 0.0
        %457 = vmatpush.msra.mxu0 0.0
        %458 = vmatpush.msra.mxu0 0.0
        %459 = vmatpush.msra.mxu0 0.0
        %460 = vmatpush.msra.mxu0 0.0
        %461 = vmatpush.msra.mxu0 0.0
        %462 = vmatpush.msra.mxu0 0.0
        %463 = vmatpush.msra.mxu0 0.0
        %464 = vmatpush.msra.mxu0 0.0
        %465 = vmatpush.msra.mxu0 0.0
        %466 = vmatpush.msra.mxu0 0.0
        %467 = vmatpush.msra.mxu0 0.0
        %468 = vmatpush.msra.mxu0 %v450
        %469 = vmatpush.msra.mxu0 %v448
        %470 = vmatpush.msra.mxu0 %v446
        %471 = vmatpush.msra.mxu0 %v444
        %472 = vmatmul.f32.gmra.mxu0 %v454
        %v473 = vpop.f32.mrf.mxu0
        %v474 = vadd.f32 0.0, %v473
        %475 = vdwg.mxu0
        %476 = vmatpush.msra.mxu0 0.0
        %477 = vmatpush.msra.mxu0 0.0
        %478 = vmatpush.msra.mxu0 0.0
        %479 = vmatpush.msra.mxu0 0.0
        %480 = vmatpush.msra.mxu0 0.0
        %481 = vmatpush.msra.mxu0 0.0
        %482 = vmatpush.msra.mxu0 0.0
        %483 = vmatpush.msra.mxu0 0.0
        %484 = vmatpush.msra.mxu0 0.0
        %485 = vmatpush.msra.mxu0 0.0
        %486 = vmatpush.msra.mxu0 0.0
        %487 = vmatpush.msra.mxu0 0.0
        %488 = vmatpush.msra.mxu0 %v451
        %489 = vmatpush.msra.mxu0 %v449
        %490 = vmatpush.msra.mxu0 %v447
        %491 = vmatpush.msra.mxu0 %v445
        %492 = vmatmul.f32.gmra.mxu0 %v454
        %v493 = vpop.f32.mrf.mxu0
        %v494 = vadd.f32 0.0, %v493
        %495 = vdwg.mxu0
        %v498 = vrot.slane %v494, 4
        %v499 = vsel %vm264, %v474, %v498
        %501 = vst [vmem:[%s228] sm:$0xff] %v499
        %502 = vst [vmem:[#allocation1] ss:$2 sm:$0xff] %v241
        %v503 = vld.sshfl [vmem:[#allocation1] sm:$0xff pattern:$0x75316420]
        %v504 = vld.sshfl [vmem:[#allocation1 + $0x8] sm:$0xff pattern:$0x75316420]
        %v507 = vsub.f32 %v474, %v503
        %v508 = vsub.f32 %v494, %v504
        %v511 = vrot.slane %v508, 4
        %v512 = vsel %vm264, %v507, %v511
        %v514 = vadd.f32 %v241, %v512
        %515 = vst [vmem:[%s221] sm:$0xff] %v514
        %v516 = vrot.slane %v427, 7
        %vm517 = vcmask 1040384
        %v518 = vsel %vm517, %v412, %v516
        %v519 = vlaneseq
        %vm520 = vcmp.ge.s32.totalorder %v519, 0
        %vm521 = vcmp.lt.s32.totalorder %v519, 256
        %vm522 = vmand %vm520, %vm521
        %523 = vst.msk [vmem:[%s235] sm:$0x3] %vm522, %v518
        %s524 = sand.u32 %s99, 1
        %s525 = scalar_lea.sflag [#allocation3], %s524
        %s526 = sand.u32 %s99, 1
        %s527 = smul.addr %s526, 8
        %s528 = scalar_lea.vmem [#allocation2], %s527
        %s529 = sand.u32 %s23, 1
        %s530 = scalar_lea.sflag [#allocation5], %s529
        %s531 = sand.u32 %s125, 1
        %s532 = smul.addr %s531, 8
        %s533 = scalar_lea.vmem [#allocation4], %s532
        %s534 = sand.u32 %s23, 1
        %s535 = scalar_lea.sflag [#allocation5], %s534
        %s536 = sand.u32 %s151, 1
        %s537 = smul.addr %s536, 2
        %s538 = scalar_lea.vmem [#allocation6], %s537
        // Predicated region
        $region33: #{tpu_custom_call.1} parent=31 // pred_check
          %p539 = pneg %p109
        $region34: #{tpu_custom_call.1} parent=31 // pred_check_branch
          %541 = sbr.rel (%p539) target = $region36
        $region35: #{tpu_custom_call.1} parent=31 // pred_region
          %543 = vsyncadd %s525, 0
          %s544 = smul.addr %s23, 2
          %s545 = smul.addr %s544, 4
          %s546 = scalar_lea.hbm %s3, %s545
          %s548 = sshll.u32 %s528, 4
          %s549 = int_to_ptr.vmem [resolvable:$true] %s548
          %s550 = sshll.u32 %s546, 4
          %s551 = int_to_ptr.hbm [resolvable:$true] %s550
          %553 = dma.vmem_to_hbm [thread:$0]  %s549, 128, %s551, %s525
        $region36: #{tpu_custom_call.1} parent=31 // pred_fallthru
          _
        // Predicated region
        $region37: #{tpu_custom_call.1} parent=31 // pred_check
          %p554 = pneg %p135
        $region38: #{tpu_custom_call.1} parent=31 // pred_check_branch
          %556 = sbr.rel (%p554) target = $region40
        $region39: #{tpu_custom_call.1} parent=31 // pred_region
          %558 = vsyncadd %s530, 0
          %s559 = smul.addr %s23, 2
          %s560 = smul.addr %s559, 4
          %s561 = scalar_lea.hbm %s4, %s560
          %s563 = sshll.u32 %s533, 4
          %s564 = int_to_ptr.vmem [resolvable:$true] %s563
          %s565 = sshll.u32 %s561, 4
          %s566 = int_to_ptr.hbm [resolvable:$true] %s565
          %568 = dma.vmem_to_hbm [thread:$0]  %s564, 128, %s566, %s530
        $region40: #{tpu_custom_call.1} parent=31 // pred_fallthru
          _
        // Predicated region
        $region41: #{tpu_custom_call.1} parent=31 // pred_check
          %p569 = pneg %p161
        $region42: #{tpu_custom_call.1} parent=31 // pred_check_branch
          %571 = sbr.rel (%p569) target = $region44
        $region43: #{tpu_custom_call.1} parent=31 // pred_region
          %573 = vsyncadd %s535, 0
          %s574 = smul.addr %s23, 2
          %s575 = scalar_lea.hbm %s5, %s574
          %s577 = sshll.u32 %s538, 4
          %s578 = int_to_ptr.vmem [resolvable:$true] %s577
          %s579 = sshll.u32 %s575, 4
          %s580 = int_to_ptr.hbm [resolvable:$true] %s579
          %582 = dma.vmem_to_hbm [thread:$0]  %s578, 32, %s580, %s535
        $region44: #{tpu_custom_call.1} parent=31 // pred_fallthru
          _
      $region32: #{tpu_custom_call.1} parent=5 // pred_fallthru
        _
      %p583 = scmp.le.s32.totalorder 2, %s18
      // Predicated region
      $region45: #{tpu_custom_call.1} parent=5 // pred_check
        %p584 = pneg %p583
      $region46: #{tpu_custom_call.1} parent=5 // pred_check_branch
        %586 = sbr.rel (%p584) target = $region48
      $region47: #{tpu_custom_call.1} parent=5 // pred_region
        %s587 = ssub.s32 %s18, 2
        // Predicated region
        $region49: #{tpu_custom_call.1} parent=47 // pred_check
          %p588 = pneg %p115
        $region50: #{tpu_custom_call.1} parent=47 // pred_check_branch
          %590 = sbr.rel (%p588) target = $region52
        $region51: #{tpu_custom_call.1} parent=47 // pred_region
          %s591 = sand.u32 %s100, 1
          %s592 = scalar_lea.sflag [#allocation3], %s591
          %s593 = sand.u32 %s100, 1
          %s594 = smul.addr %s593, 8
          %s595 = scalar_lea.vmem [#allocation2], %s594
          %597 = dma.done %s592, 128
        $region52: #{tpu_custom_call.1} parent=47 // pred_fallthru
          _
        // Predicated region
        $region53: #{tpu_custom_call.1} parent=47 // pred_check
          %p598 = pneg %p141
        $region54: #{tpu_custom_call.1} parent=47 // pred_check_branch
          %600 = sbr.rel (%p598) target = $region56
        $region55: #{tpu_custom_call.1} parent=47 // pred_region
          %s601 = sand.u32 %s24, 1
          %s602 = scalar_lea.sflag [#allocation5], %s601
          %s603 = sand.u32 %s126, 1
          %s604 = smul.addr %s603, 8
          %s605 = scalar_lea.vmem [#allocation4], %s604
          %607 = dma.done %s602, 128
        $region56: #{tpu_custom_call.1} parent=47 // pred_fallthru
          _
        // Predicated region
        $region57: #{tpu_custom_call.1} parent=47 // pred_check
          %p608 = pneg %p167
        $region58: #{tpu_custom_call.1} parent=47 // pred_check_branch
          %610 = sbr.rel (%p608) target = $region60
        $region59: #{tpu_custom_call.1} parent=47 // pred_region
          %s611 = sand.u32 %s24, 1
          %s612 = scalar_lea.sflag [#allocation5], %s611
          %s613 = sand.u32 %s152, 1
          %s614 = smul.addr %s613, 2
          %s615 = scalar_lea.vmem [#allocation6], %s614
          %617 = dma.done %s612, 32
        $region60: #{tpu_custom_call.1} parent=47 // pred_fallthru
          _
      $region48: #{tpu_custom_call.1} parent=5 // pred_fallthru
        _
    $region6: #{tpu_custom_call.1} parent=1 // loop_footer
      %s22 = sadd.s32 1, %s18
    $region7: #{tpu_custom_call.1} parent=1 // loop_footer_branch
      %17 = sbr.rel target = $region3
    $region8: #{tpu_custom_call.1} parent=1 // loop_exit
      _
    %618 = vsyncpa [#allocation3], 1
    %s619 = scalar_lea.sflag [#allocation3], 1
    %620 = vsyncpa %s619, 1
    %621 = vsyncpa [#allocation5], 1
    %s622 = scalar_lea.sflag [#allocation5], 1
    %623 = vsyncpa %s622, 1

</llo_original>
